<compile_context>
chip_gen: v6e
topology: v6e:2x2x1
jax: 0.10.0
libtpu: 0.0.40
codegen_flags: <defaults>
</compile_context>

<pallas_src>
import functools
import math

import jax
import jax.numpy as jnp
from jax.experimental import pallas as pl
from jax.experimental.pallas import tpu as pltpu


# ----------------------------------- kernels --------------------------------------

def _expec_kernel(x_ref, amp_ref, phase_ref, out_ref):
    """<Z> expectations: out = r_q * cos(ang - phi_q).

    x_ref     : (TR, W) data-encoding angles (flattened batch*qubit, lane-dense)
    amp_ref   : (1, W)  per-lane amplitude r_q  (qubit = lane % Q)
    phase_ref : (1, W)  per-lane phase phi_q
    """
    out_ref[...] = amp_ref[...] * jnp.cos(x_ref[...] - phase_ref[...])


def _sample_kernel(x_ref, amp_ref, phase_ref, u_ref, out_ref, *, mode):
    """Fused expectation + sampling ('o' hard samples / 't' soft samples)."""
    expec = amp_ref[...] * jnp.cos(x_ref[...] - phase_ref[...])
    u = u_ref[...]
    if mode == "o":
        # prior_sampling: ((expec + 1)/2 - rand >= 0) -> {0., 1.}
        out_ref[...] = ((expec + 1.0) * 0.5 - u >= 0.0).astype(jnp.float32)
    else:  # mode == "t"
        # prior_sampling_soft with temperature hardcoded to 1.0 (as in the
        # reference forward).  logit computed with log/log1p (accurate near 1).
        probs = (1.0 - expec) * 0.5
        r = u + 1e-8
        logit = jnp.log(r) - jnp.log1p(-r)          # == -log(1/r - 1)
        out_ref[...] = jax.nn.sigmoid(probs + logit)


# ------------------------- coefficient fold (wrapper side) ------------------------

def _bloch_coeffs(params, qwf):
    """Fold the batch-independent gate chain into per-qubit (a, b) with
       <Z>(ang) = a * sin(ang) + b * cos(ang).

    params : (L, Q, 4)   per-layer Rz, Rx, Rz, Rx angles
    qwf    : (Q, 3)      final Rz, Rx, Rz angles
    """
    L, Q, _ = params.shape

    def rz_mat(t):
        c, s = jnp.cos(t), jnp.sin(t)
        z, o = jnp.zeros_like(t), jnp.ones_like(t)
        return jnp.stack([jnp.stack([c, -s, z], -1),
                          jnp.stack([s, c, z], -1),
                          jnp.stack([z, z, o], -1)], -2)        # (Q, 3, 3)

    def rx_mat(t):
        c, s = jnp.cos(t), jnp.sin(t)
        z, o = jnp.zeros_like(t), jnp.ones_like(t)
        return jnp.stack([jnp.stack([o, z, z], -1),
                          jnp.stack([z, c, -s], -1),
                          jnp.stack([z, s, c], -1)], -2)        # (Q, 3, 3)

    # TODO(synk): `quantum_circuit_Noise_001` (tensorcircuit) is not provided;
    # this is a product-state Rz/Rx ansatz consistent with the declared
    # parameter shapes (noise channels / entanglers not reproduced).
    M = jnp.broadcast_to(jnp.eye(3, dtype=jnp.float32), (Q, 3, 3))
    for l in range(L):                       # tiny static loop, wrapper-side only
        M = rz_mat(params[l, :, 0]) @ M
        M = rx_mat(params[l, :, 1]) @ M
        M = rz_mat(params[l, :, 2]) @ M
        M = rx_mat(params[l, :, 3]) @ M
    M = rz_mat(qwf[:, 0]) @ M
    M = rx_mat(qwf[:, 1]) @ M
    M = rz_mat(qwf[:, 2]) @ M

    # post-encoding Bloch vector is (0, -sin(ang), cos(ang)):
    a = -M[:, 2, 1]
    b = M[:, 2, 2]
    return a, b


# ---------------------------------- wrapper ----------------------------------------

@functools.partial(jax.jit,
                   static_argnames=("measurement_setting", "temperature",
                                    "row_tile_bytes"))
def qcbm_prior_forward(inputs, params, q_weights_final, seed,
                       measurement_setting="o", temperature=1.0,
                       row_tile_bytes=1 << 20):
    """Forward of QCBMPrior001.

    inputs:          (B, nqubits)          float32 data-encoding angles
    params:          (nlayers, nqubits, 4)
    q_weights_final: (nqubits, 3)
    seed:            int seed for the sampling randoms ('o'/'t' modes)
    """
    if measurement_setting is None:
        return None                          # reference forward falls through

    inputs = inputs.astype(jnp.float32)
    B, Q = inputs.shape

    # Lane width: smallest multiple of 128 that Q divides, so the row-major
    # flattened (B*Q,) layout has a fixed qubit index per lane (qubit = lane % Q).
    W = (Q * 128) // math.gcd(Q, 128)

    N = B * Q
    rows = -(-N // W)
    rows8 = max(8, -(-rows // 8) * 8)
    # ~1 MiB f32 blocks (sublane-aligned), capped by the actual data size.
    tr = max(8, min((row_tile_bytes // (4 * W)) // 8 * 8, rows8))
    if rows8 > 8:
        # keep >= 2 grid blocks so v7x's two TensorCores are both used
        tr = min(tr, -(-rows8 // 16) * 8)
    rows_pad = -(-max(rows, 1) // tr) * tr
    n_blocks = rows_pad // tr
    total = rows_pad * W

    # Flatten row-major (free reshape, no transpose) and pad to the tiled slab.
    x_flat = jnp.pad(inputs.reshape(-1), (0, total - N)).reshape(rows_pad, W)

    # Fold the whole rotation chain into per-qubit amplitude / phase (wrapper).
    a, b = _bloch_coeffs(params.astype(jnp.float32),
                         q_weights_final.astype(jnp.float32))
    amp = jnp.sqrt(a * a + b * b)
    phase = jnp.arctan2(a, b)
    amp_l = jnp.tile(amp, W // Q).reshape(1, W)      # per-lane coefficient tiles
    phase_l = jnp.tile(phase, W // Q).reshape(1, W)

    grid = (n_blocks,)
    x_spec = pl.BlockSpec((tr, W), lambda i: (i, 0))
    coef_spec = pl.BlockSpec((1, W), lambda i: (0, 0))
    out_spec = pl.BlockSpec((tr, W), lambda i: (i, 0))
    cparams = pltpu.CompilerParams(dimension_semantics=("parallel",))
    out_shape = jax.ShapeDtypeStruct((rows_pad, W), jnp.float32)

    if measurement_setting in ("d", "s"):
        out = pl.pallas_call(
            _expec_kernel,
            out_shape=out_shape,
            grid=grid,
            in_specs=[x_spec, coef_spec, coef_spec],
            out_specs=out_spec,
            compiler_params=cparams,
        )(x_flat, amp_l, phase_l)
    else:  # 'o' or 't'
        # Uniform randoms generated per (batch, qubit) element so the sampled
        # stream does not depend on the tile size / padding.
        # TODO(synk): in-kernel pltpu.prng_* would avoid this extra HBM stream
        # but has no interpret/CPU lowering, so it is generated wrapper-side.
        key = jax.random.PRNGKey(seed)
        u = jax.random.uniform(key, (B, Q), dtype=jnp.float32)
        u_flat = jnp.pad(u.reshape(-1), (0, total - N)).reshape(rows_pad, W)

        # TODO(synk): reference 't' mode hardcodes temperature=1.0 and then
        # applies self.linear (never defined in __init__); we match the
        # hardcoded 1.0 and return the soft samples directly.
        # TODO(synk): reference 'o' mode also passes self.q_weights_basis
        # (never defined in __init__); omitted here.
        kernel = functools.partial(_sample_kernel, mode=measurement_setting)
        out = pl.pallas_call(
            kernel,
            out_shape=out_shape,
            grid=grid,
            in_specs=[x_spec, coef_spec, coef_spec, x_spec],
            out_specs=out_spec,
            compiler_params=cparams,
        )(x_flat, amp_l, phase_l, u_flat)

    # plain reshape back to (B, Q) — no transpose pass
    return out.reshape(-1)[:N].reshape(B, Q)


# -------------------------- pure-JAX reference (check) ----------------------------

def _expec_ref(inputs, params, qwf):
    B, Q = inputs.shape
    bx = jnp.zeros((B, Q), jnp.float32)
    by = jnp.zeros((B, Q), jnp.float32)
    bz = jnp.ones((B, Q), jnp.float32)

    def rx(t, bx, by, bz):
        c, s = jnp.cos(t), jnp.sin(t)
        return bx, c * by - s * bz, s * by + c * bz

    def rz(t, bx, by, bz):
        c, s = jnp.cos(t), jnp.sin(t)
        return c * bx - s * by, s * bx + c * by, bz

    bx, by, bz = rx(inputs, bx, by, bz)
    for layer in range(params.shape[0]):
        bx, by, bz = rz(params[layer, :, 0][None, :], bx, by, bz)
        bx, by, bz = rx(params[layer, :, 1][None, :], bx, by, bz)
        bx, by, bz = rz(params[layer, :, 2][None, :], bx, by, bz)
        bx, by, bz = rx(params[layer, :, 3][None, :], bx, by, bz)
    bx, by, bz = rz(qwf[:, 0][None, :], bx, by, bz)
    bx, by, bz = rx(qwf[:, 1][None, :], bx, by, bz)
    bx, by, bz = rz(qwf[:, 2][None, :], bx, by, bz)
    return bz


# ----------------------------------- main -----------------------------------------

if __name__ == "__main__":
    nqubits, nlayers, batch = 8, 4, 8

    root = jax.random.PRNGKey(0)
    k_in, k_p, k_w = jax.random.split(root, 3)

    inputs = jax.random.normal(k_in, (batch, nqubits), dtype=jnp.float32)
    params = 0.1 * jax.random.normal(k_p, (nlayers, nqubits, 4), dtype=jnp.float32)
    q_weights_final = 0.1 * jax.random.normal(k_w, (nqubits, 3), dtype=jnp.float32)
    seed = 1234

    samples = qcbm_prior_forward(inputs, params, q_weights_final, seed,
                                 measurement_setting="o")
    expec = qcbm_prior_forward(inputs, params, q_weights_final, seed,
                               measurement_setting="d")
    soft = qcbm_prior_forward(inputs, params, q_weights_final, seed,
                              measurement_setting="t")
    jax.block_until_ready((samples, expec, soft))

    assert samples.shape == (batch, nqubits) and samples.dtype == jnp.float32
    assert expec.shape == (batch, nqubits) and expec.dtype == jnp.float32
    assert soft.shape == (batch, nqubits) and soft.dtype == jnp.float32

    # pure-JAX reference check of the expectation path (validates the
    # coefficient folding done in the wrapper)
    expec_ref = _expec_ref(inputs, params, q_weights_final)
    assert bool(jnp.allclose(expec, expec_ref, atol=1e-5, rtol=1e-5))

    # hard samples in {0,1}; expectations in [-1,1]; soft samples in [0,1]
    assert bool(jnp.all((samples == 0.0) | (samples == 1.0)))
    assert bool(jnp.all(jnp.abs(expec) <= 1.0 + 1e-5))
    assert bool(jnp.all((soft >= 0.0) & (soft <= 1.0)))

    print("KERNEL_OK")
</pallas_src>

<mosaic_0001>
module attributes {stable_mosaic.version = 11 : i64} {
  func.func @_sample_kernel(%arg0: i32, %arg1: memref<8x128xf32, #tpu.memory_space<vmem>>, %arg2: memref<1x128xf32, #tpu.memory_space<vmem>>, %arg3: memref<1x128xf32, #tpu.memory_space<vmem>>, %arg4: memref<8x128xf32, #tpu.memory_space<vmem>>, %arg5: memref<8x128xf32, #tpu.memory_space<vmem>>) attributes {dimension_semantics = [#tpu.dimension_semantics<parallel>], iteration_bounds = array<i64: 1>, scalar_prefetch = 0 : i64, scratch_operands = 0 : i64, tpu.core_type = #tpu.core_type<tc>, window_params = [{transform_indices = @transform_0, window_bounds = array<i64: 8, 128>}, {pipeline_mode = #tpu.pipeline_mode<synchronous>, transform_indices = @transform_1, window_bounds = array<i64: 1, 128>}, {pipeline_mode = #tpu.pipeline_mode<synchronous>, transform_indices = @transform_2, window_bounds = array<i64: 1, 128>}, {transform_indices = @transform_3, window_bounds = array<i64: 8, 128>}, {transform_indices = @transform_4, window_bounds = array<i64: 8, 128>}]} {
    %c0 = arith.constant 0 : index
    %c0_0 = arith.constant 0 : index
    %0 = vector.load %arg2[%c0, %c0_0] : memref<1x128xf32, #tpu.memory_space<vmem>>, vector<1x128xf32>
    %c0_1 = arith.constant 0 : index
    %c0_2 = arith.constant 0 : index
    %1 = vector.load %arg1[%c0_1, %c0_2] : memref<8x128xf32, #tpu.memory_space<vmem>>, vector<8x128xf32>
    %c0_3 = arith.constant 0 : index
    %c0_4 = arith.constant 0 : index
    %2 = vector.load %arg3[%c0_3, %c0_4] : memref<1x128xf32, #tpu.memory_space<vmem>>, vector<1x128xf32>
    %3 = vector.broadcast %2 : vector<1x128xf32> to vector<8x128xf32>
    %4 = arith.subf %1, %3 : vector<8x128xf32>
    %5 = math.cos %4 : vector<8x128xf32>
    %6 = vector.broadcast %0 : vector<1x128xf32> to vector<8x128xf32>
    %7 = arith.mulf %6, %5 : vector<8x128xf32>
    %c0_5 = arith.constant 0 : index
    %c0_6 = arith.constant 0 : index
    %8 = vector.load %arg4[%c0_5, %c0_6] : memref<8x128xf32, #tpu.memory_space<vmem>>, vector<8x128xf32>
    %cst = arith.constant 1.000000e+00 : f32
    %9 = vector.broadcast %cst : f32 to vector<8x128xf32>
    %10 = arith.addf %7, %9 : vector<8x128xf32>
    %cst_7 = arith.constant 5.000000e-01 : f32
    %11 = vector.broadcast %cst_7 : f32 to vector<8x128xf32>
    %12 = arith.mulf %10, %11 : vector<8x128xf32>
    %13 = arith.subf %12, %8 : vector<8x128xf32>
    %cst_8 = arith.constant 0.000000e+00 : f32
    %14 = vector.broadcast %cst_8 : f32 to vector<8x128xf32>
    %15 = arith.cmpf oge, %13, %14 : vector<8x128xf32>
    %16 = arith.extui %15 : vector<8x128xi1> to vector<8x128xi32>
    %17 = arith.sitofp %16 : vector<8x128xi32> to vector<8x128xf32>
    %c0_9 = arith.constant 0 : index
    %c0_10 = arith.constant 0 : index
    %18 = vector.load %arg5[%c0_9, %c0_10] : memref<8x128xf32, #tpu.memory_space<vmem>>, vector<8x128xf32>
    tpu.vector_store %arg5[%c0_9, %c0_10], %17 {strides = array<i32>} : memref<8x128xf32, #tpu.memory_space<vmem>>, vector<8x128xf32>,
    return
  }
  func.func @transform_0(%arg0: i32) -> (i32, i32) {
    %c0_i32 = arith.constant 0 : i32
    %c0_i32_0 = arith.constant 0 : i32
    return %arg0, %c0_i32 : i32, i32
  }
  func.func @transform_1(%arg0: i32) -> (i32, i32) {
    %c0_i32 = arith.constant 0 : i32
    %c0_i32_0 = arith.constant 0 : i32
    %c0_i32_1 = arith.constant 0 : i32
    return %c0_i32, %c0_i32_0 : i32, i32
  }
  func.func @transform_2(%arg0: i32) -> (i32, i32) {
    %c0_i32 = arith.constant 0 : i32
    %c0_i32_0 = arith.constant 0 : i32
    %c0_i32_1 = arith.constant 0 : i32
    return %c0_i32, %c0_i32_0 : i32, i32
  }
  func.func @transform_3(%arg0: i32) -> (i32, i32) {
    %c0_i32 = arith.constant 0 : i32
    %c0_i32_0 = arith.constant 0 : i32
    return %arg0, %c0_i32 : i32, i32
  }
  func.func @transform_4(%arg0: i32) -> (i32, i32) {
    %c0_i32 = arith.constant 0 : i32
    %c0_i32_0 = arith.constant 0 : i32
    return %arg0, %c0_i32 : i32, i32
  }
}

</mosaic_0001>

<llo_original>
// kernel: tile.13
$region0: #{tile.13}
  #allocation0 [shape = 's32[1]{0}', space=sflag, size = 0x4, scoped, tag = 'scoped memory for tile.13']
  %s0 = inlined_call_operand.vmem [shape: f32[8], index: 0, kind: input, shape index: {}]
  %s1 = inlined_call_operand.vmem [shape: f32[16,8], index: 1, kind: output, shape index: {}]
  // Predicated region
  $region2: #{tile.13} parent=0 // pred_check
    _
  $region3: #{tile.13} parent=0 // pred_check_branch
    %3 = sbr.rel (0) target = $region5
  $region4: #{tile.13} parent=0 // pred_region
    _
  $region5: #{tile.13} parent=0 // pred_fallthru
    _
  %v4 = vld [vmem:[%s0] ss:$0 sm:$0xff]
  %5 = vst [vmem:[%s1] sm:$0xff] %v4
  %s6 = scalar_lea.vmem %s1, 8
  %7 = vst [vmem:[%s6] sm:$0xff] %v4

// kernel: tile.14
$region0: #{tile.14}
  %s0 = inlined_call_operand.vmem [shape: f32[16,8], index: 0, kind: input, shape index: {}]
  %s1 = inlined_call_operand.vmem [shape: f32[1,128], index: 1, kind: output, shape index: {}]
  $region1: #{tile.14} parent=0
    #allocation0 [shape = 'u8[4096]{0}', space=vmem, size = 0x1000, scoped, tag = 'scoped mem for output reshape']
    %v2 = vld [vmem:[%s0] sm:$0x1]
    %vm3 = vcmask 64512
    %4 = vst.msk [vmem:[#allocation0] sm:$0x1] %vm3, %v2
    %s5 = scalar_lea.vmem %s0, 15
    %v6 = vld [vmem:[%s5] sm:$0x1]
    %7 = vrot.lane.b32.xlu0 %v6, 120
    %v8 = vpop.permute.xlu0 %7
    %vm9 = vcmask 1048512
    %10 = vst.msk [vmem:[#allocation0] sm:$0x1] %vm9, %v8
    %s11 = scalar_lea.vmem %s0, 14
    %v12 = vld [vmem:[%s11] sm:$0x1]
    %13 = vrot.lane.b32.xlu0 %v12, 112
    %v14 = vpop.permute.xlu0 %13
    %vm15 = vcmask 982912
    %16 = vst.msk [vmem:[#allocation0] sm:$0x1] %vm15, %v14
    %s17 = scalar_lea.vmem %s0, 13
    %v18 = vld [vmem:[%s17] sm:$0x1]
    %19 = vrot.lane.b32.xlu0 %v18, 104
    %v20 = vpop.permute.xlu0 %19
    %vm21 = vcmask 917312
    %22 = vst.msk [vmem:[#allocation0] sm:$0x1] %vm21, %v20
    %s23 = scalar_lea.vmem %s0, 12
    %v24 = vld [vmem:[%s23] sm:$0x1]
    %25 = vrot.lane.b32.xlu0 %v24, 96
    %v26 = vpop.permute.xlu0 %25
    %vm27 = vcmask 851712
    %28 = vst.msk [vmem:[#allocation0] sm:$0x1] %vm27, %v26
    %s29 = scalar_lea.vmem %s0, 11
    %v30 = vld [vmem:[%s29] sm:$0x1]
    %31 = vrot.lane.b32.xlu0 %v30, 88
    %v32 = vpop.permute.xlu0 %31
    %vm33 = vcmask 786112
    %34 = vst.msk [vmem:[#allocation0] sm:$0x1] %vm33, %v32
    %s35 = scalar_lea.vmem %s0, 10
    %v36 = vld [vmem:[%s35] sm:$0x1]
    %37 = vrot.lane.b32.xlu0 %v36, 80
    %v38 = vpop.permute.xlu0 %37
    %vm39 = vcmask 720512
    %40 = vst.msk [vmem:[#allocation0] sm:$0x1] %vm39, %v38
    %s41 = scalar_lea.vmem %s0, 9
    %v42 = vld [vmem:[%s41] sm:$0x1]
    %43 = vrot.lane.b32.xlu0 %v42, 72
    %v44 = vpop.permute.xlu0 %43
    %vm45 = vcmask 654912
    %46 = vst.msk [vmem:[#allocation0] sm:$0x1] %vm45, %v44
    %s47 = scalar_lea.vmem %s0, 8
    %v48 = vld [vmem:[%s47] sm:$0x1]
    %49 = vrot.lane.b32.xlu0 %v48, 64
    %v50 = vpop.permute.xlu0 %49
    %vm51 = vcmask 589312
    %52 = vst.msk [vmem:[#allocation0] sm:$0x1] %vm51, %v50
    %s53 = scalar_lea.vmem %s0, 7
    %v54 = vld [vmem:[%s53] sm:$0x1]
    %55 = vrot.lane.b32.xlu0 %v54, 56
    %v56 = vpop.permute.xlu0 %55
    %vm57 = vcmask 523712
    %58 = vst.msk [vmem:[#allocation0] sm:$0x1] %vm57, %v56
    %s59 = scalar_lea.vmem %s0, 6
    %v60 = vld [vmem:[%s59] sm:$0x1]
    %61 = vrot.lane.b32.xlu0 %v60, 48
    %v62 = vpop.permute.xlu0 %61
    %vm63 = vcmask 458112
    %64 = vst.msk [vmem:[#allocation0] sm:$0x1] %vm63, %v62
    %s65 = scalar_lea.vmem %s0, 5
    %v66 = vld [vmem:[%s65] sm:$0x1]
    %67 = vrot.lane.b32.xlu0 %v66, 40
    %v68 = vpop.permute.xlu0 %67
    %vm69 = vcmask 392512
    %70 = vst.msk [vmem:[#allocation0] sm:$0x1] %vm69, %v68
    %s71 = scalar_lea.vmem %s0, 4
    %v72 = vld [vmem:[%s71] sm:$0x1]
    %73 = vrot.lane.b32.xlu0 %v72, 32
    %v74 = vpop.permute.xlu0 %73
    %vm75 = vcmask 326912
    %76 = vst.msk [vmem:[#allocation0] sm:$0x1] %vm75, %v74
    %s77 = scalar_lea.vmem %s0, 3
    %v78 = vld [vmem:[%s77] sm:$0x1]
    %79 = vrot.lane.b32.xlu0 %v78, 24
    %v80 = vpop.permute.xlu0 %79
    %vm81 = vcmask 261312
    %82 = vst.msk [vmem:[#allocation0] sm:$0x1] %vm81, %v80
    %s83 = scalar_lea.vmem %s0, 2
    %v84 = vld [vmem:[%s83] sm:$0x1]
    %85 = vrot.lane.b32.xlu0 %v84, 16
    %v86 = vpop.permute.xlu0 %85
    %vm87 = vcmask 195712
    %88 = vst.msk [vmem:[#allocation0] sm:$0x1] %vm87, %v86
    %s89 = scalar_lea.vmem %s0, 1
    %v90 = vld [vmem:[%s89] sm:$0x1]
    %91 = vrot.lane.b32.xlu0 %v90, 8
    %v92 = vpop.permute.xlu0 %91
    %vm93 = vcmask 130112
    %94 = vst.msk [vmem:[#allocation0] sm:$0x1] %vm93, %v92
    %s96 = sshll.u32 1, 1
    %s97 = ssub.s32 %s96, 1
    %v99 = vld [vmem:[#allocation0] sm:%s97]
    %s100 = sshll.u32 1, 1
    %s101 = ssub.s32 %s100, 1
    %102 = vst [vmem:[%s1] sm:%s101] %v99

// kernel: qcbm_prior_forward.1
$region0: #{qcbm_prior_forward.1}
  #allocation0 [shape = 'u32[]', space=smem, size = 0x4, offset = 0x4, fixed_abs, tag = 'smem constant byte address 0x4 - core index']
  #allocation1 [shape = 'u32[144,128]{1,0:T(1,128)}', space=vmem, size = 0x12000, scoped, tag = 'internal scratch']
  %s0 = inlined_call_operand.vmem [shape: f32[8,128], index: 0, kind: input, shape index: {}]
  %s1 = inlined_call_operand.vmem [shape: f32[1,128], index: 1, kind: input, shape index: {}]
  %s2 = inlined_call_operand.vmem [shape: f32[1,128], index: 2, kind: input, shape index: {}]
  %s3 = inlined_call_operand.vmem [shape: f32[8,128], index: 3, kind: input, shape index: {}]
  %s4 = inlined_call_operand.vmem [shape: f32[8,128], index: 4, kind: output, shape index: {}]
  %s5 = sld [smem:[#allocation0]]
  $region26: #{qcbm_prior_forward.1} parent=0
    _
  %s7 = ssub.s32 1, %s5
  %s8 = scalar_select 0, %s7, %s5
  // Predicated region
  $region2: #{qcbm_prior_forward.1} parent=0 // pred_check
    _
  $region3: #{qcbm_prior_forward.1} parent=0 // pred_check_branch
    %10 = sbr.rel (0) target = $region5
  $region4: #{qcbm_prior_forward.1} parent=0 // pred_region
    _
  $region5: #{qcbm_prior_forward.1} parent=0 // pred_fallthru
    _
  // Predicated region
  $region6: #{qcbm_prior_forward.1} parent=0 // pred_check
    _
  $region7: #{qcbm_prior_forward.1} parent=0 // pred_check_branch
    %12 = sbr.rel (0) target = $region9
  $region8: #{qcbm_prior_forward.1} parent=0 // pred_region
    _
  $region9: #{qcbm_prior_forward.1} parent=0 // pred_fallthru
    _
  // Predicated region
  $region10: #{qcbm_prior_forward.1} parent=0 // pred_check
    _
  $region11: #{qcbm_prior_forward.1} parent=0 // pred_check_branch
    %14 = sbr.rel (0) target = $region13
  $region12: #{qcbm_prior_forward.1} parent=0 // pred_region
    _
  $region13: #{qcbm_prior_forward.1} parent=0 // pred_fallthru
    _
  // Predicated region
  $region14: #{qcbm_prior_forward.1} parent=0 // pred_check
    _
  $region15: #{qcbm_prior_forward.1} parent=0 // pred_check_branch
    %16 = sbr.rel (0) target = $region17
  $region16: #{qcbm_prior_forward.1} parent=0 // pred_region
    _
  $region17: #{qcbm_prior_forward.1} parent=0 // pred_fallthru
    _
  %v17 = vld [vmem:[%s1] sm:$0x1]
  %v18 = vld [vmem:[%s0] sm:$0xff]
  %v19 = vld [vmem:[%s2] sm:$0x1]
  %v21 = vlaneseq
  %v22 = vshrl.u32 %v21, 7
  %v23 = vsub.s32 0, %v22
  %v24 = vrot.slane %v19, %v23
  %v26 = vsub.f32 %v18, %v24
  %v27 = vand.u32 2147483647, %v26
  %vm28 = vcmp.le.f32.partialorder %v27, 0.7853982
  %vm29 = vcmp.lt.s32.totalorder %v26, 0
  %v30 = vand.u32 %v26, 2139095040
  %v31 = vshrl.u32 %v30, 23
  %v32 = vsub.s32 %v31, 127
  %v33 = vand.u32 2147483647, %v26
  %v34 = vand.u32 %v33, 8388607
  %v35 = vor.u32 %v34, 8388608
  %v36 = vsub.s32 0, %v35
  %v37 = vadd.s32 %v32, 1
  %vm38 = vcmp.gt.s32.totalorder %v37, 0
  %v39 = vsel %vm38, %v37, 0
  %v40 = vshrl.u32 %v39, 5
  %v41 = vand.u32 %v39, 31
  %v42 = vsub.s32 32, %v41
  %v43 = vshrl.u32 683565275, %v42
  %v44 = vshll.u32 683565275, %v41
  %v45 = vshrl.u32 2475754826, %v42
  %v46 = vor.u32 %v44, %v45
  %v47 = vshll.u32 2475754826, %v41
  %v48 = vshrl.u32 2131351028, %v42
  %v49 = vor.u32 %v47, %v48
  %v50 = vshll.u32 2131351028, %v41
  %v51 = vshrl.u32 2102212464, %v42
  %v52 = vor.u32 %v50, %v51
  %v53 = vshll.u32 2102212464, %v41
  %v54 = vshrl.u32 920167782, %v42
  %v55 = vor.u32 %v53, %v54
  %v56 = vshll.u32 920167782, %v41
  %v57 = vshrl.u32 1326507024, %v42
  %v58 = vor.u32 %v56, %v57
  %vm59 = vcmp.lt.s32.totalorder %v40, 1
  %vm60 = vcmp.lt.s32.totalorder %v40, 2
  %vm61 = vcmp.lt.s32.totalorder %v40, 3
  %vm62 = vcmp.lt.s32.totalorder %v40, 4
  %v63 = vsel %vm59, %v43, %v46
  %v64 = vsel %vm62, %v52, 2102212464
  %v65 = vsel %vm61, %v49, %v64
  %v66 = vsel %vm60, %v63, %v65
  %v67 = vsel %vm59, %v46, %v49
  %v68 = vsel %vm62, %v55, 920167782
  %v69 = vsel %vm61, %v52, %v68
  %v70 = vsel %vm60, %v67, %v69
  %v71 = vsel %vm59, %v49, %v52
  %v72 = vsel %vm62, %v58, 1326507024
  %v73 = vsel %vm61, %v55, %v72
  %v74 = vsel %vm60, %v71, %v73
  %v75 = vshll.u32 %v35, 8
  %v76 = vmul.u32.u64.compose %v75, %v74
  %v77 = vextract.low.u32 %v76
  %v78 = vextract.high.u32 %v76
  %v79 = vmul.u32.u64.compose %v75, %v70
  %v80 = vextract.low.u32 %v79
  %v81 = vextract.high.u32 %v79
  %v82 = vmul.u32 %v75, %v66
  %v83 = vadd.s32 %v78, %v80
  %vm84 = vc.u32 %v78, %v80
  %v85 = vadd.s32 %v81, 1
  %v86 = vsel %vm84, %v85, %v81
  %v87 = vadd.s32 %v82, %v86
  %v88 = vadd.s32 %v87, 536870912
  %v89 = vshrl.u32 %v88, 30
  %v90 = vshll.u32 %v89, 30
  %v91 = vsub.s32 %v87, %v90
  %vm92 = vcmp.lt.s32.totalorder %v91, 0
  %v93 = vsub.s32 0, %v91
  %v94 = vsel %vm92, %v93, %v91
  %v95 = vclz %v94
  %v96 = vsub.s32 %v95, 2
  %vm97 = vcmp.gt.s32.totalorder 0, %v96
  %v98 = vsel %vm97, 0, %v96
  %v99 = vsub.s32 32, %v98
  %v100 = vshll.u32 %v91, %v98
  %v101 = vshrl.u32 %v83, %v99
  %v102 = vor.u32 %v100, %v101
  %v103 = vsub.s32 4294967266, %v98
  %v104 = vadd.s32 %v103, 127
  %v105 = vshll.u32 %v104, 23
  %v106 = vor.u32 4788187, %v105
  %v107 = vand.u32 2147483647, %v106
  %v109 = vcvt.s32.f32 %v102
  %v110 = vmul.f32 %v109, %v107
  %v111 = vxor.u32 %v110, 2147483648
  %v112 = vsel %vm29, %v111, %v110
  %v113 = vsub.s32 4, %v89
  %v114 = vsel %vm29, %v113, %v89
  %v115 = vsel %vm28, %v26, %v112
  %v116 = vsel %vm28, 0, %v114
  %v117 = vcosq.f32.pop %v115
  %v118 = vsinq.f32.pop %v115
  %vm119 = vweird.f32 %v26
  %v120 = vand.u32 %v116, 3
  %vm121 = vcmp.lt.s32.totalorder %v120, 2
  %vm122 = vcmp.eq.s32.totalorder %v120, 0
  %v123 = vxor.u32 %v118, 2147483648
  %v124 = vsel %vm122, %v117, %v123
  %vm125 = vcmp.eq.s32.totalorder %v120, 2
  %v126 = vxor.u32 %v117, 2147483648
  %v127 = vsel %vm125, %v126, %v118
  %v128 = vsel %vm121, %v124, %v127
  %v129 = vsel %vm119, nan, %v128
  %v131 = vlaneseq
  %v132 = vshrl.u32 %v131, 7
  %v133 = vsub.s32 0, %v132
  %v134 = vrot.slane %v17, %v133
  %v136 = vmul.f32 %v134, %v129
  %v137 = vld [vmem:[%s3] sm:$0xff]
  %v138 = vadd.f32 %v136, 1.0
  %v139 = vmul.f32 %v138, 0.5
  %v140 = vsub.f32 %v139, %v137
  %vm141 = vcmp.ge.f32.partialorder %v140, 0.0
  %v142 = vsel %vm141, 1, 0
  %v143 = vcvt.s32.f32 %v142
  %144 = vst [vmem:[%s4] sm:$0xff] %v143
  // Predicated region
  $region18: #{qcbm_prior_forward.1} parent=0 // pred_check
    _
  $region19: #{qcbm_prior_forward.1} parent=0 // pred_check_branch
    %146 = sbr.rel (0) target = $region21
  $region20: #{qcbm_prior_forward.1} parent=0 // pred_region
    _
  $region21: #{qcbm_prior_forward.1} parent=0 // pred_fallthru
    _
  // Predicated region
  $region22: #{qcbm_prior_forward.1} parent=0 // pred_check
    _
  $region23: #{qcbm_prior_forward.1} parent=0 // pred_check_branch
    %148 = sbr.rel (0) target = $region25
  $region24: #{qcbm_prior_forward.1} parent=0 // pred_region
    _
  $region25: #{qcbm_prior_forward.1} parent=0 // pred_fallthru
    _

</llo_original>
